<compile_context>
chip_gen: v6e
topology: v6e:2x2x1
jax: 0.10.0
libtpu: 0.0.40
codegen_flags: <defaults>
</compile_context>

<pallas_src>
import math

import jax
import jax.numpy as jnp
from jax.experimental import pallas as pl
from jax.experimental.pallas import tpu as pltpu


# ----------------------------------------------------------------------------
# Pallas kernel body: full self-attention for a (bt, C, S) batch tile.
# ----------------------------------------------------------------------------
def _self_attention_kernel(x_ref, wq_ref, wkv_ref, bq_ref, bkv_ref, out_ref):
    bt, C, S = x_ref.shape

    # Grid-invariant operands: load once per grid step, reuse across the tile.
    wq = wq_ref[...]        # (C, C)      query 1x1-conv weight
    wkv = wkv_ref[...]      # (2C, C)     [Wk ; Wv] fused
    bq = bq_ref[...]        # (C, 1)
    bkv = bkv_ref[...]      # (2C, 1)     [bk ; bv] fused

    def body(b, carry):
        x_cm = x_ref[b]                                                  # (C, S)

        # 1x1 convolutions == per-pixel linear maps over channels.
        q = jnp.dot(wq, x_cm, preferred_element_type=jnp.float32) + bq      # (C, S)
        kv = jnp.dot(wkv, x_cm, preferred_element_type=jnp.float32) + bkv   # (2C, S)
        v = kv[C:, :]                                                    # (C, S)
        kv_t = kv.T                                                      # (S, 2C)
        k_sm = kv_t[:, :C]                                               # (S, C)

        # st[j, i] = sum_c K[c, j] Q[c, i]  == scores^T  (keys x queries).
        st = jnp.dot(k_sm, q, preferred_element_type=jnp.float32)        # (S, S)

        # Softmax over keys == axis 0 of st, with deferred normalisation.
        m = jnp.max(st, axis=0, keepdims=True)                           # (1, S)
        e = jnp.exp(st - m)                                              # (S, S) f32
        l = jnp.sum(e, axis=0, keepdims=True)                            # (1, S) f32
        r = pl.reciprocal(l, approx=True)                                # EUP

        # out_un[c, i] = sum_j V[c, j] e[j, i]   (bf16 MXU, f32 accumulation)
        out_un = jnp.dot(v.astype(jnp.bfloat16), e.astype(jnp.bfloat16),
                         preferred_element_type=jnp.float32)             # (C, S)

        # Per-query normalisation: (1, S) broadcasts along channels for free.
        out_ref[b] = (out_un * r).astype(out_ref.dtype)
        return carry

    jax.lax.fori_loop(0, bt, body, None, unroll=True)


# ----------------------------------------------------------------------------
# Wrapper: layout glue + pallas_call.
# ----------------------------------------------------------------------------
def _pick_batch_tile(batch):
    """Largest divisor of `batch` <= min(8, max(1, batch // 2)).

    Keeps at least two grid steps whenever batch >= 2 (so the v7x megacore
    gets both TensorCores busy) while amortising per-grid-step overhead.
    """
    limit = min(8, max(1, batch // 2))
    bt = 1
    for d in range(1, limit + 1):
        if batch % d == 0:
            bt = d
    return bt


def self_attention(x, wq, bq, wk, bk, wv, bv):
    """x: (B, C, H, W). wq/wk/wv: (C, C, 1, 1) torch Conv2d weights. b*: (C,)."""
    B, C, H, W = x.shape
    S = H * W
    f32 = jnp.float32

    x_cm = x.reshape(B, C, S).astype(f32)             # == torch .view(B, C, H*W)
    wq2 = wq.reshape(C, C).astype(f32)
    w_kv = jnp.concatenate([wk.reshape(C, C), wv.reshape(C, C)], axis=0).astype(f32)
    bq_col = bq.reshape(C, 1).astype(f32)
    b_kv = jnp.concatenate([bk.reshape(C, 1), bv.reshape(C, 1)], axis=0).astype(f32)

    bt = _pick_batch_tile(B)

    grid_spec = pltpu.PrefetchScalarGridSpec(
        num_scalar_prefetch=0,
        grid=(B // bt,),
        in_specs=[
            pl.BlockSpec((bt, C, S), lambda i: (i, 0, 0)),     # x, channel-major
            pl.BlockSpec((C, C), lambda i: (0, 0)),            # Wq
            pl.BlockSpec((2 * C, C), lambda i: (0, 0)),        # [Wk ; Wv]
            pl.BlockSpec((C, 1), lambda i: (0, 0)),            # bq
            pl.BlockSpec((2 * C, 1), lambda i: (0, 0)),        # [bk ; bv]
        ],
        out_specs=pl.BlockSpec((bt, C, S), lambda i: (i, 0, 0)),
    )

    out = pl.pallas_call(
        _self_attention_kernel,
        out_shape=jax.ShapeDtypeStruct((B, C, S), f32),
        grid_spec=grid_spec,
        compiler_params=pltpu.CompilerParams(
            dimension_semantics=("parallel",)),   # batch tiles across TCs on v7x
    )(x_cm, wq2, w_kv, bq_col, b_kv)

    return out.reshape(B, C, H, W)


# ----------------------------------------------------------------------------
# Pure-JAX reference (mirrors the PyTorch module) for a correctness check.
# ----------------------------------------------------------------------------
def self_attention_reference(x, wq, bq, wk, bk, wv, bv):
    B, C, H, W = x.shape
    S = H * W
    xf = x.reshape(B, C, S).astype(jnp.float32)

    def conv1x1(w, b):
        return (jnp.einsum("oc,bcs->bos", w.reshape(C, C).astype(jnp.float32), xf)
                + b.reshape(1, C, 1).astype(jnp.float32))

    q = conv1x1(wq, bq)
    k = conv1x1(wk, bk)
    v = conv1x1(wv, bv)
    scores = jnp.einsum("bci,bcj->bij", q, k)          # (B, S, S)
    a = jax.nn.softmax(scores, axis=-1)
    out = jnp.einsum("bci,bki->bck", v, a)             # (B, C, S)
    return out.reshape(B, C, H, W)


# ----------------------------------------------------------------------------
# Demo / self-test.
# ----------------------------------------------------------------------------
def init_params(key, C):
    ks = jax.random.split(key, 6)
    bound = 1.0 / math.sqrt(C)                         # torch Conv2d default-ish init
    u = lambda k, shp: jax.random.uniform(k, shp, jnp.float32, -bound, bound)
    return {
        "wq": u(ks[0], (C, C, 1, 1)), "bq": u(ks[1], (C,)),
        "wk": u(ks[2], (C, C, 1, 1)), "bk": u(ks[3], (C,)),
        "wv": u(ks[4], (C, C, 1, 1)), "bv": u(ks[5], (C,)),
    }


if __name__ == "__main__":
    key = jax.random.PRNGKey(0)
    kp, kx = jax.random.split(key)
    B, C, H, W = 2, 4, 16, 16
    params = init_params(kp, C)
    x = jax.random.normal(kx, (B, C, H, W), jnp.float32)

    fwd = jax.jit(lambda x, p: self_attention(
        x, p["wq"], p["bq"], p["wk"], p["bk"], p["wv"], p["bv"]))
    out = jax.block_until_ready(fwd(x, params))

    assert out.shape == (B, C, H, W)
    assert bool(jnp.all(jnp.isfinite(out)))

    ref = self_attention_reference(
        x, params["wq"], params["bq"], params["wk"], params["bk"],
        params["wv"], params["bv"])
    assert bool(jnp.allclose(out, ref, atol=5e-2, rtol=5e-2))

    print("KERNEL_OK")
</pallas_src>

<mosaic_0001>
module attributes {stable_mosaic.version = 11 : i64} {
  func.func @_self_attention_kernel(%arg0: i32, %arg1: memref<1x4x256xf32, #tpu.memory_space<vmem>>, %arg2: memref<4x4xf32, #tpu.memory_space<vmem>>, %arg3: memref<8x4xf32, #tpu.memory_space<vmem>>, %arg4: memref<4x1xf32, #tpu.memory_space<vmem>>, %arg5: memref<8x1xf32, #tpu.memory_space<vmem>>, %arg6: memref<1x4x256xf32, #tpu.memory_space<vmem>>) attributes {dimension_semantics = [#tpu.dimension_semantics<parallel>], iteration_bounds = array<i64: 2>, scalar_prefetch = 0 : i64, scratch_operands = 0 : i64, tpu.core_type = #tpu.core_type<tc>, window_params = [{transform_indices = @transform_0, window_bounds = array<i64: 1, 4, 256>}, {pipeline_mode = #tpu.pipeline_mode<synchronous>, transform_indices = @transform_1, window_bounds = array<i64: 4, 4>}, {pipeline_mode = #tpu.pipeline_mode<synchronous>, transform_indices = @transform_2, window_bounds = array<i64: 8, 4>}, {pipeline_mode = #tpu.pipeline_mode<synchronous>, transform_indices = @transform_3, window_bounds = array<i64: 4, 1>}, {pipeline_mode = #tpu.pipeline_mode<synchronous>, transform_indices = @transform_4, window_bounds = array<i64: 8, 1>}, {transform_indices = @transform_5, window_bounds = array<i64: 1, 4, 256>}]} {
    %c0 = arith.constant 0 : index
    %c0_0 = arith.constant 0 : index
    %0 = vector.load %arg2[%c0, %c0_0] : memref<4x4xf32, #tpu.memory_space<vmem>>, vector<4x4xf32>
    %c0_1 = arith.constant 0 : index
    %c0_2 = arith.constant 0 : index
    %1 = vector.load %arg3[%c0_1, %c0_2] : memref<8x4xf32, #tpu.memory_space<vmem>>, vector<8x4xf32>
    %c0_3 = arith.constant 0 : index
    %c0_4 = arith.constant 0 : index
    %2 = vector.load %arg4[%c0_3, %c0_4] : memref<4x1xf32, #tpu.memory_space<vmem>>, vector<4x1xf32>
    %c0_5 = arith.constant 0 : index
    %c0_6 = arith.constant 0 : index
    %3 = vector.load %arg5[%c0_5, %c0_6] : memref<8x1xf32, #tpu.memory_space<vmem>>, vector<8x1xf32>
    %c0_i32 = arith.constant 0 : i32
    %4 = arith.index_cast %c0_i32 : i32 to index
    %c0_7 = arith.constant 0 : index
    %c0_8 = arith.constant 0 : index
    %5 = vector.load %arg1[%4, %c0_7, %c0_8] : memref<1x4x256xf32, #tpu.memory_space<vmem>>, vector<1x4x256xf32>
    %6 = vector.shape_cast %5 : vector<1x4x256xf32> to vector<4x256xf32>
    %cst = arith.constant dense<0.000000e+00> : vector<4x256xf32>
    %7 = tpu.matmul %0, %6, %cst {dimension_numbers = #tpu.dot_dimension_numbers<[1], [0], [0], [1], [0, 0, 1, 1], [], []>} : vector<4x4xf32>, vector<4x256xf32>, vector<4x256xf32> -> vector<4x256xf32>
    %8 = vector.broadcast %2 : vector<4x1xf32> to vector<4x256xf32>
    %9 = arith.addf %7, %8 : vector<4x256xf32>
    %cst_9 = arith.constant dense<0.000000e+00> : vector<8x256xf32>
    %10 = tpu.matmul %1, %6, %cst_9 {dimension_numbers = #tpu.dot_dimension_numbers<[1], [0], [0], [1], [0, 0, 1, 1], [], []>} : vector<8x4xf32>, vector<4x256xf32>, vector<8x256xf32> -> vector<8x256xf32>
    %11 = vector.broadcast %3 : vector<8x1xf32> to vector<8x256xf32>
    %12 = arith.addf %10, %11 : vector<8x256xf32>
    %13 = vector.extract_strided_slice %12 {offsets = [4, 0], sizes = [4, 256], strides = [1, 1]} : vector<8x256xf32> to vector<4x256xf32>
    %14 = tpu.transpose %12, [1, 0] : vector<8x256xf32> -> vector<256x8xf32>
    %15 = vector.extract_strided_slice %14 {offsets = [0, 0], sizes = [256, 4], strides = [1, 1]} : vector<256x8xf32> to vector<256x4xf32>
    %cst_10 = arith.constant dense<0.000000e+00> : vector<256x256xf32>
    %16 = tpu.matmul %15, %9, %cst_10 {dimension_numbers = #tpu.dot_dimension_numbers<[1], [0], [0], [1], [0, 0, 1, 1], [], []>} : vector<256x4xf32>, vector<4x256xf32>, vector<256x256xf32> -> vector<256x256xf32>
    %cst_11 = arith.constant dense<0xFF800000> : vector<256xf32>
    %17 = vector.multi_reduction <maximumf>, %16, %cst_11 [0] : vector<256x256xf32> to vector<256xf32>
    %18 = vector.shape_cast %17 : vector<256xf32> to vector<1x256xf32>
    %19 = vector.broadcast %18 : vector<1x256xf32> to vector<256x256xf32>
    %20 = arith.subf %16, %19 : vector<256x256xf32>
    %21 = math.exp %20 : vector<256x256xf32>
    %cst_12 = arith.constant dense<0.000000e+00> : vector<256xf32>
    %22 = vector.multi_reduction <add>, %21, %cst_12 [0] : vector<256x256xf32> to vector<256xf32>
    %23 = vector.shape_cast %22 : vector<256xf32> to vector<1x256xf32>
    %24 = tpu.reciprocal %23 {approx = true} : vector<1x256xf32> -> vector<1x256xf32>
    %25 = arith.truncf %13 : vector<4x256xf32> to vector<4x256xbf16>
    %26 = arith.truncf %21 : vector<256x256xf32> to vector<256x256xbf16>
    %cst_13 = arith.constant dense<0.000000e+00> : vector<4x256xf32>
    %27 = tpu.matmul %25, %26, %cst_13 {dimension_numbers = #tpu.dot_dimension_numbers<[1], [0], [0], [1], [0, 0, 1, 1], [], []>} : vector<4x256xbf16>, vector<256x256xbf16>, vector<4x256xf32> -> vector<4x256xf32>
    %28 = vector.broadcast %24 : vector<1x256xf32> to vector<4x256xf32>
    %29 = arith.mulf %27, %28 : vector<4x256xf32>
    %30 = arith.index_cast %c0_i32 : i32 to index
    %c0_14 = arith.constant 0 : index
    %c0_15 = arith.constant 0 : index
    %31 = vector.load %arg6[%30, %c0_14, %c0_15] : memref<1x4x256xf32, #tpu.memory_space<vmem>>, vector<1x4x256xf32>
    %32 = vector.shape_cast %31 : vector<1x4x256xf32> to vector<4x256xf32>
    %33 = vector.shape_cast %29 : vector<4x256xf32> to vector<1x4x256xf32>
    tpu.vector_store %arg6[%30, %c0_14, %c0_15], %33 {strides = array<i32>} : memref<1x4x256xf32, #tpu.memory_space<vmem>>, vector<1x4x256xf32>,
    %c1_i32 = arith.constant 1 : i32
    return
  }
  func.func @transform_0(%arg0: i32) -> (i32, i32, i32) {
    %c0_i32 = arith.constant 0 : i32
    %c0_i32_0 = arith.constant 0 : i32
    %c0_i32_1 = arith.constant 0 : i32
    return %arg0, %c0_i32, %c0_i32_0 : i32, i32, i32
  }
  func.func @transform_1(%arg0: i32) -> (i32, i32) {
    %c0_i32 = arith.constant 0 : i32
    %c0_i32_0 = arith.constant 0 : i32
    %c0_i32_1 = arith.constant 0 : i32
    return %c0_i32, %c0_i32_0 : i32, i32
  }
  func.func @transform_2(%arg0: i32) -> (i32, i32) {
    %c0_i32 = arith.constant 0 : i32
    %c0_i32_0 = arith.constant 0 : i32
    %c0_i32_1 = arith.constant 0 : i32
    return %c0_i32, %c0_i32_0 : i32, i32
  }
  func.func @transform_3(%arg0: i32) -> (i32, i32) {
    %c0_i32 = arith.constant 0 : i32
    %c0_i32_0 = arith.constant 0 : i32
    %c0_i32_1 = arith.constant 0 : i32
    return %c0_i32, %c0_i32_0 : i32, i32
  }
  func.func @transform_4(%arg0: i32) -> (i32, i32) {
    %c0_i32 = arith.constant 0 : i32
    %c0_i32_0 = arith.constant 0 : i32
    %c0_i32_1 = arith.constant 0 : i32
    return %c0_i32, %c0_i32_0 : i32, i32
  }
  func.func @transform_5(%arg0: i32) -> (i32, i32, i32) {
    %c0_i32 = arith.constant 0 : i32
    %c0_i32_0 = arith.constant 0 : i32
    %c0_i32_1 = arith.constant 0 : i32
    return %arg0, %c0_i32, %c0_i32_0 : i32, i32, i32
  }
}

</mosaic_0001>

<llo_original>
// kernel: _lambda_.1
$region0: #{_lambda_.1}
  #allocation0 [shape = 'u32[]', space=smem, size = 0x4, offset = 0x4, fixed_abs, tag = 'smem constant byte address 0x4 - core index']
  #allocation1 [shape = 'u32[144,128]{1,0:T(1,128)}', space=vmem, size = 0x12000, scoped, tag = 'internal scratch']
  %s0 = inlined_call_operand.vmem [shape: f32[2,4,256], index: 0, kind: input, shape index: {}]
  %s1 = inlined_call_operand.vmem [shape: f32[4,4], index: 1, kind: input, shape index: {}]
  %s2 = inlined_call_operand.vmem [shape: f32[8,4], index: 2, kind: input, shape index: {}]
  %s3 = inlined_call_operand.vmem [shape: f32[4,1], index: 3, kind: input, shape index: {}]
  %s4 = inlined_call_operand.vmem [shape: f32[8,1], index: 4, kind: input, shape index: {}]
  %s5 = inlined_call_operand.vmem [shape: f32[2,4,256], index: 5, kind: output, shape index: {}]
  %s6 = sld [smem:[#allocation0]]
  $region53: #{_lambda_.1} parent=0
    _
  %s8 = ssub.s32 1, %s6
  %s9 = scalar_select 0, %s8, %s6
  loop: start=0, step=1, limit=4
  $region2: #{_lambda_.1} parent=0 // loop_pre_header
    _
  $region3: #{_lambda_.1} parent=0 // loop_header
    %s11 = sphi 0, %s15
    %p12 = scmp.ge.s32.totalorder %s11, 4
    %s21 = sphi 0, %s23
    %s24 = sphi 0, %s21
    %s25 = sphi 0, %s24
    %s41 = sphi 0, %s25
    %s45 = sphi 0, %s45
    %s47 = sphi 0, %s45
    %s48 = sphi 0, %s47
    %s62 = sphi 0, %s48
    %s66 = sphi 0, %s66
    %s68 = sphi 0, %s66
    %s69 = sphi 0, %s68
    %s83 = sphi 0, %s69
    %s87 = sphi 0, %s87
    %s89 = sphi 0, %s87
    %s90 = sphi 0, %s89
    %s104 = sphi 0, %s90
    %s108 = sphi 0, %s108
    %s110 = sphi 0, %s108
    %s111 = sphi 0, %s110
    %s125 = sphi 0, %s111
    %s131 = sphi 0, %s133
    %s134 = sphi 0, %s131
    %s135 = sphi 0, %s134
    %s151 = sphi 0, %s135
  $region4: #{_lambda_.1} parent=0 // loop_header_branch
    %14 = sbr.rel (%p12) target = $region8
  $region5: #{_lambda_.1} parent=0 // loop_body
    %s16 = ssub.s32 %s11, 1
    %s17 = ssub.s32 %s11, 2
    %s18 = sadd.s32 %s11, 1
    %s19 = ssub.s32 %s11, %s18
    %p20 = scmp.eq.s32.totalorder %s19, 0
    %s22 = sadd.s32 %s21, 1
    %s23 = scalar_select %p20, %s21, %s22
    %p26 = pneg %p20
    %p27 = scmp.eq.s32.totalorder %s11, 1
    %p28 = por %p26, %p27
    %p29 = scmp.ne.s32.totalorder %s21, %s24
    %p30 = scmp.eq.s32.totalorder %s11, 0
    %p31 = por %p29, %p30
    %p32 = scmp.ne.s32.totalorder %s21, %s24
    %p33 = scmp.eq.s32.totalorder %s16, 1
    %p34 = por %p32, %p33
    %p35 = scmp.ne.s32.totalorder %s24, %s25
    %p36 = scmp.eq.s32.totalorder %s16, 0
    %p37 = por %p35, %p36
    %p38 = scmp.ne.s32.totalorder %s24, %s25
    %p39 = scmp.eq.s32.totalorder %s17, 1
    %p40 = por %p38, %p39
    %p42 = scmp.ne.s32.totalorder %s25, %s41
    %p43 = scmp.eq.s32.totalorder %s17, 0
    %p44 = por %p42, %p43
    %s46 = sadd.s32 %s45, 1
    %p49 = scmp.eq.s32.totalorder %s11, 1
    %p50 = scmp.ne.s32.totalorder %s45, %s47
    %p51 = scmp.eq.s32.totalorder %s11, 0
    %p52 = por %p50, %p51
    %p53 = scmp.ne.s32.totalorder %s45, %s47
    %p54 = scmp.eq.s32.totalorder %s16, 1
    %p55 = por %p53, %p54
    %p56 = scmp.ne.s32.totalorder %s47, %s48
    %p57 = scmp.eq.s32.totalorder %s16, 0
    %p58 = por %p56, %p57
    %p59 = scmp.ne.s32.totalorder %s47, %s48
    %p60 = scmp.eq.s32.totalorder %s17, 1
    %p61 = por %p59, %p60
    %p63 = scmp.ne.s32.totalorder %s48, %s62
    %p64 = scmp.eq.s32.totalorder %s17, 0
    %p65 = por %p63, %p64
    %s67 = sadd.s32 %s66, 1
    %p70 = scmp.eq.s32.totalorder %s11, 1
    %p71 = scmp.ne.s32.totalorder %s66, %s68
    %p72 = scmp.eq.s32.totalorder %s11, 0
    %p73 = por %p71, %p72
    %p74 = scmp.ne.s32.totalorder %s66, %s68
    %p75 = scmp.eq.s32.totalorder %s16, 1
    %p76 = por %p74, %p75
    %p77 = scmp.ne.s32.totalorder %s68, %s69
    %p78 = scmp.eq.s32.totalorder %s16, 0
    %p79 = por %p77, %p78
    %p80 = scmp.ne.s32.totalorder %s68, %s69
    %p81 = scmp.eq.s32.totalorder %s17, 1
    %p82 = por %p80, %p81
    %p84 = scmp.ne.s32.totalorder %s69, %s83
    %p85 = scmp.eq.s32.totalorder %s17, 0
    %p86 = por %p84, %p85
    %s88 = sadd.s32 %s87, 1
    %p91 = scmp.eq.s32.totalorder %s11, 1
    %p92 = scmp.ne.s32.totalorder %s87, %s89
    %p93 = scmp.eq.s32.totalorder %s11, 0
    %p94 = por %p92, %p93
    %p95 = scmp.ne.s32.totalorder %s87, %s89
    %p96 = scmp.eq.s32.totalorder %s16, 1
    %p97 = por %p95, %p96
    %p98 = scmp.ne.s32.totalorder %s89, %s90
    %p99 = scmp.eq.s32.totalorder %s16, 0
    %p100 = por %p98, %p99
    %p101 = scmp.ne.s32.totalorder %s89, %s90
    %p102 = scmp.eq.s32.totalorder %s17, 1
    %p103 = por %p101, %p102
    %p105 = scmp.ne.s32.totalorder %s90, %s104
    %p106 = scmp.eq.s32.totalorder %s17, 0
    %p107 = por %p105, %p106
    %s109 = sadd.s32 %s108, 1
    %p112 = scmp.eq.s32.totalorder %s11, 1
    %p113 = scmp.ne.s32.totalorder %s108, %s110
    %p114 = scmp.eq.s32.totalorder %s11, 0
    %p115 = por %p113, %p114
    %p116 = scmp.ne.s32.totalorder %s108, %s110
    %p117 = scmp.eq.s32.totalorder %s16, 1
    %p118 = por %p116, %p117
    %p119 = scmp.ne.s32.totalorder %s110, %s111
    %p120 = scmp.eq.s32.totalorder %s16, 0
    %p121 = por %p119, %p120
    %p122 = scmp.ne.s32.totalorder %s110, %s111
    %p123 = scmp.eq.s32.totalorder %s17, 1
    %p124 = por %p122, %p123
    %p126 = scmp.ne.s32.totalorder %s111, %s125
    %p127 = scmp.eq.s32.totalorder %s17, 0
    %p128 = por %p126, %p127
    %s129 = ssub.s32 %s11, %s18
    %p130 = scmp.eq.s32.totalorder %s129, 0
    %s132 = sadd.s32 %s131, 1
    %s133 = scalar_select %p130, %s131, %s132
    %p136 = pneg %p130
    %p137 = scmp.eq.s32.totalorder %s11, 1
    %p138 = por %p136, %p137
    %p139 = scmp.ne.s32.totalorder %s131, %s134
    %p140 = scmp.eq.s32.totalorder %s11, 0
    %p141 = por %p139, %p140
    %p142 = scmp.ne.s32.totalorder %s131, %s134
    %p143 = scmp.eq.s32.totalorder %s16, 1
    %p144 = por %p142, %p143
    %p145 = scmp.ne.s32.totalorder %s134, %s135
    %p146 = scmp.eq.s32.totalorder %s16, 0
    %p147 = por %p145, %p146
    %p148 = scmp.ne.s32.totalorder %s134, %s135
    %p149 = scmp.eq.s32.totalorder %s17, 1
    %p150 = por %p148, %p149
    %p152 = scmp.ne.s32.totalorder %s135, %s151
    %p153 = scmp.eq.s32.totalorder %s17, 0
    %p154 = por %p152, %p153
    %p155 = scmp.le.s32.totalorder 1, %s11
    %p156 = scmp.lt.s32.totalorder %s11, 3
    %p157 = pnand %p155, %p156
    %p158 = pneg %p157
    // Predicated region
    $region9: #{_lambda_.1} parent=5 // pred_check
      _
    $region10: #{_lambda_.1} parent=5 // pred_check_branch
      %160 = sbr.rel (%p157) target = $region12
    $region11: #{_lambda_.1} parent=5 // pred_region
      %s161 = ssub.s32 %s11, 1
      // Predicated region
      $region13: #{_lambda_.1} parent=11 // pred_check
        %p162 = pneg %p58
      $region14: #{_lambda_.1} parent=11 // pred_check_branch
        %164 = sbr.rel (%p162) target = $region16
      $region15: #{_lambda_.1} parent=11 // pred_region
        _
      $region16: #{_lambda_.1} parent=11 // pred_fallthru
        _
      // Predicated region
      $region17: #{_lambda_.1} parent=11 // pred_check
        %p165 = pneg %p79
      $region18: #{_lambda_.1} parent=11 // pred_check_branch
        %167 = sbr.rel (%p165) target = $region20
      $region19: #{_lambda_.1} parent=11 // pred_region
        _
      $region20: #{_lambda_.1} parent=11 // pred_fallthru
        _
      // Predicated region
      $region21: #{_lambda_.1} parent=11 // pred_check
        %p168 = pneg %p100
      $region22: #{_lambda_.1} parent=11 // pred_check_branch
        %170 = sbr.rel (%p168) target = $region24
      $region23: #{_lambda_.1} parent=11 // pred_region
        _
      $region24: #{_lambda_.1} parent=11 // pred_fallthru
        _
      // Predicated region
      $region25: #{_lambda_.1} parent=11 // pred_check
        %p171 = pneg %p121
      $region26: #{_lambda_.1} parent=11 // pred_check_branch
        %173 = sbr.rel (%p171) target = $region28
      $region27: #{_lambda_.1} parent=11 // pred_region
        _
      $region28: #{_lambda_.1} parent=11 // pred_fallthru
        _
    $region12: #{_lambda_.1} parent=5 // pred_fallthru
      _
    %p174 = scmp.lt.s32.totalorder %s11, 2
    // Predicated region
    $region29: #{_lambda_.1} parent=5 // pred_check
      %p175 = pneg %p174
    $region30: #{_lambda_.1} parent=5 // pred_check_branch
      %177 = sbr.rel (%p175) target = $region32
    $region31: #{_lambda_.1} parent=5 // pred_region
      // Predicated region
      $region33: #{_lambda_.1} parent=31 // pred_check
        %p178 = pneg %p31
      $region34: #{_lambda_.1} parent=31 // pred_check_branch
        %180 = sbr.rel (%p178) target = $region36
      $region35: #{_lambda_.1} parent=31 // pred_region
        %p181 = scmp.lt.s32.totalorder %s11, 1
        %s182 = scalar_select %p181, %s11, 1
        %s183 = smul.addr %s182, 2
        %s184 = smul.addr %s183, 4
        %s185 = scalar_lea.vmem %s0, %s184
      $region36: #{_lambda_.1} parent=31 // pred_fallthru
        _
    $region32: #{_lambda_.1} parent=5 // pred_fallthru
      _
    %p186 = scmp.le.s32.totalorder 1, %s11
    %p187 = scmp.lt.s32.totalorder %s11, 3
    %p188 = pnand %p186, %p187
    %p189 = pneg %p188
    // Predicated region
    $region37: #{_lambda_.1} parent=5 // pred_check
      _
    $region38: #{_lambda_.1} parent=5 // pred_check_branch
      %191 = sbr.rel (%p188) target = $region40
    $region39: #{_lambda_.1} parent=5 // pred_region
      %s192 = ssub.s32 %s11, 1
      %p193 = scmp.lt.s32.totalorder %s16, 1
      %s194 = scalar_select %p193, %s16, 1
      %s195 = smul.addr %s194, 2
      %s196 = smul.addr %s195, 4
      %s197 = scalar_lea.vmem %s0, %s196
      %p198 = pneg %p37
      %p199 = pneg %p34
      %p200 = pneg %p58
      %p201 = pneg %p55
      %p202 = pneg %p79
      %p203 = pneg %p76
      %p204 = pneg %p100
      %p205 = pneg %p97
      %p206 = pneg %p121
      %p207 = pneg %p118
      %p208 = pneg %p147
      %p209 = pneg %p144
      %p210 = scmp.lt.s32.totalorder %s16, 1
      %s211 = scalar_select %p210, %s16, 1
      %s212 = smul.addr %s211, 2
      %s213 = smul.addr %s212, 4
      %s214 = scalar_lea.vmem %s5, %s213
      %p215 = scmp.lt.s32.totalorder %s16, 1
      %s216 = scalar_select %p215, %s16, 1
      %s217 = smul.addr %s216, 2
      %s218 = smul.addr %s217, 4
      %s219 = scalar_lea.vmem %s0, %s218
      %p220 = scmp.lt.s32.totalorder %s16, 1
      %s221 = scalar_select %p220, %s16, 1
      %s222 = smul.addr %s221, 2
      %s223 = smul.addr %s222, 4
      %s224 = scalar_lea.vmem %s5, %s223
      %v225 = vld [vmem:[%s1] sm:$0xf]
      %v226 = vld [vmem:[%s2] sm:$0xff]
      %v227 = vld [vmem:[%s3] sm:$0xf]
      %v228 = vld [vmem:[%s4] sm:$0xff]
      %v229 = vld [vmem:[%s219] sm:$0xff]
      %231 = vset.pattern.permute.xlu0 0
      %232 = vperm.xlu0 %231, %v227
      %v233 = vpop.permute.xlu0 %232
      %v236 = vcombine.high %v229, %v229
      %vm237 = vcmask 31744
      %v239 = vsel %vm237, %v225, 0
      %vm241 = vcmask 1043456
      %v242 = vsel %vm241, %v229, 0
      %v244 = vsel %vm241, %v236, 0
      %246 = vmatprep.subr.mxu0 0.0
      %247 = vmatpush1.msra.mxu0 0.0
      %248 = vmatprep.subr.mxu0 0.0
      %249 = vmatpush1.msra.mxu0 0.0
      %250 = vmatprep.subr.mxu0 0.0
      %251 = vmatpush1.msra.mxu0 0.0
      %252 = vmatprep.subr.mxu0 0.0
      %253 = vmatpush1.msra.mxu0 0.0
      %254 = vmatprep.subr.mxu0 0.0
      %255 = vmatpush1.msra.mxu0 0.0
      %256 = vmatprep.subr.mxu0 0.0
      %257 = vmatpush1.msra.mxu0 0.0
      %258 = vmatprep.subr.mxu0 0.0
      %259 = vmatpush1.msra.mxu0 0.0
      %260 = vmatprep.subr.mxu0 0.0
      %261 = vmatpush1.msra.mxu0 0.0
      %262 = vmatprep.subr.mxu0 0.0
      %263 = vmatpush1.msra.mxu0 0.0
      %264 = vmatprep.subr.mxu0 0.0
      %265 = vmatpush1.msra.mxu0 0.0
      %266 = vmatprep.subr.mxu0 0.0
      %267 = vmatpush1.msra.mxu0 0.0
      %268 = vmatprep.subr.mxu0 0.0
      %269 = vmatpush1.msra.mxu0 0.0
      %270 = vmatprep.subr.mxu0 0.0
      %271 = vmatpush1.msra.mxu0 0.0
      %272 = vmatprep.subr.mxu0 0.0
      %273 = vmatpush1.msra.mxu0 0.0
      %274 = vmatprep.subr.mxu0 0.0
      %275 = vmatpush1.msra.mxu0 0.0
      %276 = vmatprep.subr.mxu0 %v244
      %277 = vmatpush1.msra.mxu0 %v242
      %278 = vmatprep.subr.mxu0 0.0
      %279 = vmatpush2.msra.mxu0 0.0
      %280 = vmatprep.subr.mxu0 0.0
      %281 = vmatpush2.msra.mxu0 0.0
      %282 = vmatprep.subr.mxu0 0.0
      %283 = vmatpush2.msra.mxu0 0.0
      %284 = vmatprep.subr.mxu0 0.0
      %285 = vmatpush2.msra.mxu0 0.0
      %286 = vmatprep.subr.mxu0 0.0
      %287 = vmatpush2.msra.mxu0 0.0
      %288 = vmatprep.subr.mxu0 0.0
      %289 = vmatpush2.msra.mxu0 0.0
      %290 = vmatprep.subr.mxu0 0.0
      %291 = vmatpush2.msra.mxu0 0.0
      %292 = vmatprep.subr.mxu0 0.0
      %293 = vmatpush2.msra.mxu0 0.0
      %294 = vmatprep.subr.mxu0 0.0
      %295 = vmatpush2.msra.mxu0 0.0
      %296 = vmatprep.subr.mxu0 0.0
      %297 = vmatpush2.msra.mxu0 0.0
      %298 = vmatprep.subr.mxu0 0.0
      %299 = vmatpush2.msra.mxu0 0.0
      %300 = vmatprep.subr.mxu0 0.0
      %301 = vmatpush2.msra.mxu0 0.0
      %302 = vmatprep.subr.mxu0 0.0
      %303 = vmatpush2.msra.mxu0 0.0
      %304 = vmatprep.subr.mxu0 0.0
      %305 = vmatpush2.msra.mxu0 0.0
      %306 = vmatprep.subr.mxu0 0.0
      %307 = vmatpush2.msra.mxu0 0.0
      %308 = vmatprep.subr.mxu0 0.0
      %309 = vmatpush2.msra.mxu0 0.0
      %310 = vmatprep.mubr.f32.mxu0 0.0
      %311 = vmatmul.mubr.f32.gmra.mxu0 %v239
      %v312 = vpop.f32.mrf.mxu0
      %v313 = vadd.f32 %v233, %v312
      %v314 = vpop.f32.mrf.mxu0
      %v315 = vadd.f32 %v233, %v314
      %316 = vdwg.mxu0
      %318 = vset.pattern.permute.xlu0 0
      %319 = vperm.xlu0 %318, %v228
      %v320 = vpop.permute.xlu0 %319
      %v323 = vsel %vm237, %v226, 0
      %325 = vmatprep.subr.mxu0 0.0
      %326 = vmatpush1.msra.mxu0 0.0
      %327 = vmatprep.subr.mxu0 0.0
      %328 = vmatpush1.msra.mxu0 0.0
      %329 = vmatprep.subr.mxu0 0.0
      %330 = vmatpush1.msra.mxu0 0.0
      %331 = vmatprep.subr.mxu0 0.0
      %332 = vmatpush1.msra.mxu0 0.0
      %333 = vmatprep.subr.mxu0 0.0
      %334 = vmatpush1.msra.mxu0 0.0
      %335 = vmatprep.subr.mxu0 0.0
      %336 = vmatpush1.msra.mxu0 0.0
      %337 = vmatprep.subr.mxu0 0.0
      %338 = vmatpush1.msra.mxu0 0.0
      %339 = vmatprep.subr.mxu0 0.0
      %340 = vmatpush1.msra.mxu0 0.0
      %341 = vmatprep.subr.mxu0 0.0
      %342 = vmatpush1.msra.mxu0 0.0
      %343 = vmatprep.subr.mxu0 0.0
      %344 = vmatpush1.msra.mxu0 0.0
      %345 = vmatprep.subr.mxu0 0.0
      %346 = vmatpush1.msra.mxu0 0.0
      %347 = vmatprep.subr.mxu0 0.0
      %348 = vmatpush1.msra.mxu0 0.0
      %349 = vmatprep.subr.mxu0 0.0
      %350 = vmatpush1.msra.mxu0 0.0
      %351 = vmatprep.subr.mxu0 0.0
      %352 = vmatpush1.msra.mxu0 0.0
      %353 = vmatprep.subr.mxu0 0.0
      %354 = vmatpush1.msra.mxu0 0.0
      %355 = vmatprep.subr.mxu0 %v244
      %356 = vmatpush1.msra.mxu0 %v242
      %357 = vmatprep.subr.mxu0 0.0
      %358 = vmatpush2.msra.mxu0 0.0
      %359 = vmatprep.subr.mxu0 0.0
      %360 = vmatpush2.msra.mxu0 0.0
      %361 = vmatprep.subr.mxu0 0.0
      %362 = vmatpush2.msra.mxu0 0.0
      %363 = vmatprep.subr.mxu0 0.0
      %364 = vmatpush2.msra.mxu0 0.0
      %365 = vmatprep.subr.mxu0 0.0
      %366 = vmatpush2.msra.mxu0 0.0
      %367 = vmatprep.subr.mxu0 0.0
      %368 = vmatpush2.msra.mxu0 0.0
      %369 = vmatprep.subr.mxu0 0.0
      %370 = vmatpush2.msra.mxu0 0.0
      %371 = vmatprep.subr.mxu0 0.0
      %372 = vmatpush2.msra.mxu0 0.0
      %373 = vmatprep.subr.mxu0 0.0
      %374 = vmatpush2.msra.mxu0 0.0
      %375 = vmatprep.subr.mxu0 0.0
      %376 = vmatpush2.msra.mxu0 0.0
      %377 = vmatprep.subr.mxu0 0.0
      %378 = vmatpush2.msra.mxu0 0.0
      %379 = vmatprep.subr.mxu0 0.0
      %380 = vmatpush2.msra.mxu0 0.0
      %381 = vmatprep.subr.mxu0 0.0
      %382 = vmatpush2.msra.mxu0 0.0
      %383 = vmatprep.subr.mxu0 0.0
      %384 = vmatpush2.msra.mxu0 0.0
      %385 = vmatprep.subr.mxu0 0.0
      %386 = vmatpush2.msra.mxu0 0.0
      %387 = vmatprep.subr.mxu0 0.0
      %388 = vmatpush2.msra.mxu0 0.0
      %389 = vmatprep.mubr.f32.mxu0 0.0
      %390 = vmatmul.mubr.f32.gmra.mxu0 %v323
      %v391 = vpop.f32.mrf.mxu0
      %v392 = vadd.f32 %v320, %v391
      %v393 = vpop.f32.mrf.mxu0
      %v394 = vadd.f32 %v320, %v393
      %395 = vdwg.mxu0
      %396 = vxpose.xlu0.b32.start [1/16] %v392, 128
      %397 = vxpose.xlu0.b32.cont [2/16] 0.0, 128
      %398 = vxpose.xlu0.b32.cont [3/16] 0.0, 128
      %399 = vxpose.xlu0.b32.cont [4/16] 0.0, 128
      %400 = vxpose.xlu0.b32.cont [5/16] 0.0, 128
      %401 = vxpose.xlu0.b32.cont [6/16] 0.0, 128
      %402 = vxpose.xlu0.b32.cont [7/16] 0.0, 128
      %403 = vxpose.xlu0.b32.cont [8/16] 0.0, 128
      %404 = vxpose.xlu0.b32.cont [9/16] 0.0, 128
      %405 = vxpose.xlu0.b32.cont [10/16] 0.0, 128
      %406 = vxpose.xlu0.b32.cont [11/16] 0.0, 128
      %407 = vxpose.xlu0.b32.cont [12/16] 0.0, 128
      %408 = vxpose.xlu0.b32.cont [13/16] 0.0, 128
      %409 = vxpose.xlu0.b32.cont [14/16] 0.0, 128
      %410 = vxpose.xlu0.b32.cont [15/16] 0.0, 128
      %411 = vxpose.xlu0.b32.end [16/16] 0.0, 128
      %v412 = vpop.trf.xlu0
      %v413 = vpop.trf.xlu0
      %v414 = vpop.trf.xlu0
      %v415 = vpop.trf.xlu0
      %v416 = vpop.trf.xlu0
      %v417 = vpop.trf.xlu0
      %v418 = vpop.trf.xlu0
      %v419 = vpop.trf.xlu0
      %v420 = vpop.trf.xlu0
      %v421 = vpop.trf.xlu0
      %v422 = vpop.trf.xlu0
      %v423 = vpop.trf.xlu0
      %v424 = vpop.trf.xlu0
      %v425 = vpop.trf.xlu0
      %v426 = vpop.trf.xlu0
      %v427 = vpop.trf.xlu0
      %428 = vxpose.xlu0.b32.start [1/16] %v394, 128
      %429 = vxpose.xlu0.b32.cont [2/16] 0.0, 128
      %430 = vxpose.xlu0.b32.cont [3/16] 0.0, 128
      %431 = vxpose.xlu0.b32.cont [4/16] 0.0, 128
      %432 = vxpose.xlu0.b32.cont [5/16] 0.0, 128
      %433 = vxpose.xlu0.b32.cont [6/16] 0.0, 128
      %434 = vxpose.xlu0.b32.cont [7/16] 0.0, 128
      %435 = vxpose.xlu0.b32.cont [8/16] 0.0, 128
      %436 = vxpose.xlu0.b32.cont [9/16] 0.0, 128
      %437 = vxpose.xlu0.b32.cont [10/16] 0.0, 128
      %438 = vxpose.xlu0.b32.cont [11/16] 0.0, 128
      %439 = vxpose.xlu0.b32.cont [12/16] 0.0, 128
      %440 = vxpose.xlu0.b32.cont [13/16] 0.0, 128
      %441 = vxpose.xlu0.b32.cont [14/16] 0.0, 128
      %442 = vxpose.xlu0.b32.cont [15/16] 0.0, 128
      %443 = vxpose.xlu0.b32.end [16/16] 0.0, 128
      %v444 = vpop.trf.xlu0
      %v445 = vpop.trf.xlu0
      %v446 = vpop.trf.xlu0
      %v447 = vpop.trf.xlu0
      %v448 = vpop.trf.xlu0
      %v449 = vpop.trf.xlu0
      %v450 = vpop.trf.xlu0
      %v451 = vpop.trf.xlu0
      %v452 = vpop.trf.xlu0
      %v453 = vpop.trf.xlu0
      %v454 = vpop.trf.xlu0
      %v455 = vpop.trf.xlu0
      %v456 = vpop.trf.xlu0
      %v457 = vpop.trf.xlu0
      %v458 = vpop.trf.xlu0
      %v459 = vpop.trf.xlu0
      %v461 = vsel %vm237, %v412, 0
      %v464 = vsel %vm237, %v413, 0
      %v467 = vsel %vm237, %v414, 0
      %v470 = vsel %vm237, %v415, 0
      %v473 = vsel %vm237, %v416, 0
      %v476 = vsel %vm237, %v417, 0
      %v479 = vsel %vm237, %v418, 0
      %v482 = vsel %vm237, %v419, 0
      %v485 = vsel %vm237, %v420, 0
      %v488 = vsel %vm237, %v421, 0
      %v491 = vsel %vm237, %v422, 0
      %v494 = vsel %vm237, %v423, 0
      %v497 = vsel %vm237, %v424, 0
      %v500 = vsel %vm237, %v425, 0
      %v503 = vsel %vm237, %v426, 0
      %v506 = vsel %vm237, %v427, 0
      %v509 = vsel %vm237, %v444, 0
      %v512 = vsel %vm237, %v445, 0
      %v515 = vsel %vm237, %v446, 0
      %v518 = vsel %vm237, %v447, 0
      %v521 = vsel %vm237, %v448, 0
      %v524 = vsel %vm237, %v449, 0
      %v527 = vsel %vm237, %v450, 0
      %v530 = vsel %vm237, %v451, 0
      %v533 = vsel %vm237, %v452, 0
      %v536 = vsel %vm237, %v453, 0
      %v539 = vsel %vm237, %v454, 0
      %v542 = vsel %vm237, %v455, 0
      %v545 = vsel %vm237, %v456, 0
      %v548 = vsel %vm237, %v457, 0
      %v551 = vsel %vm237, %v458, 0
      %v554 = vsel %vm237, %v459, 0
      %v557 = vsel %vm241, %v313, 0
      %v560 = vsel %vm241, %v315, 0
      %562 = vmatprep.subr.mxu0 0.0
      %563 = vmatpush1.msra.mxu0 0.0
      %564 = vmatprep.subr.mxu0 0.0
      %565 = vmatpush1.msra.mxu0 0.0
      %566 = vmatprep.subr.mxu0 0.0
      %567 = vmatpush1.msra.mxu0 0.0
      %568 = vmatprep.subr.mxu0 0.0
      %569 = vmatpush1.msra.mxu0 0.0
      %570 = vmatprep.subr.mxu0 0.0
      %571 = vmatpush1.msra.mxu0 0.0
      %572 = vmatprep.subr.mxu0 0.0
      %573 = vmatpush1.msra.mxu0 0.0
      %574 = vmatprep.subr.mxu0 0.0
      %575 = vmatpush1.msra.mxu0 0.0
      %576 = vmatprep.subr.mxu0 0.0
      %577 = vmatpush1.msra.mxu0 0.0
      %578 = vmatprep.subr.mxu0 0.0
      %579 = vmatpush1.msra.mxu0 0.0
      %580 = vmatprep.subr.mxu0 0.0
      %581 = vmatpush1.msra.mxu0 0.0
      %582 = vmatprep.subr.mxu0 0.0
      %583 = vmatpush1.msra.mxu0 0.0
      %584 = vmatprep.subr.mxu0 0.0
      %585 = vmatpush1.msra.mxu0 0.0
      %586 = vmatprep.subr.mxu0 0.0
      %587 = vmatpush1.msra.mxu0 0.0
      %588 = vmatprep.subr.mxu0 0.0
      %589 = vmatpush1.msra.mxu0 0.0
      %590 = vmatprep.subr.mxu0 0.0
      %591 = vmatpush1.msra.mxu0 0.0
      %592 = vmatprep.subr.mxu0 %v560
      %593 = vmatpush1.msra.mxu0 %v557
      %594 = vmatprep.subr.mxu0 0.0
      %595 = vmatpush2.msra.mxu0 0.0
      %596 = vmatprep.subr.mxu0 0.0
      %597 = vmatpush2.msra.mxu0 0.0
      %598 = vmatprep.subr.mxu0 0.0
      %599 = vmatpush2.msra.mxu0 0.0
      %600 = vmatprep.subr.mxu0 0.0
      %601 = vmatpush2.msra.mxu0 0.0
      %602 = vmatprep.subr.mxu0 0.0
      %603 = vmatpush2.msra.mxu0 0.0
      %604 = vmatprep.subr.mxu0 0.0
      %605 = vmatpush2.msra.mxu0 0.0
      %606 = vmatprep.subr.mxu0 0.0
      %607 = vmatpush2.msra.mxu0 0.0
      %608 = vmatprep.subr.mxu0 0.0
      %609 = vmatpush2.msra.mxu0 0.0
      %610 = vmatprep.subr.mxu0 0.0
      %611 = vmatpush2.msra.mxu0 0.0
      %612 = vmatprep.subr.mxu0 0.0
      %613 = vmatpush2.msra.mxu0 0.0
      %614 = vmatprep.subr.mxu0 0.0
      %615 = vmatpush2.msra.mxu0 0.0
      %616 = vmatprep.subr.mxu0 0.0
      %617 = vmatpush2.msra.mxu0 0.0
      %618 = vmatprep.subr.mxu0 0.0
      %619 = vmatpush2.msra.mxu0 0.0
      %620 = vmatprep.subr.mxu0 0.0
      %621 = vmatpush2.msra.mxu0 0.0
      %622 = vmatprep.subr.mxu0 0.0
      %623 = vmatpush2.msra.mxu0 0.0
      %624 = vmatprep.subr.mxu0 0.0
      %625 = vmatpush2.msra.mxu0 0.0
      %626 = vmatprep.mubr.f32.mxu0 0.0
      %627 = vmatmul.mubr.f32.gmra.mxu0 %v461
      %v628 = vpop.f32.mrf.mxu0
      %v629 = vadd.f32 0.0, %v628
      %v630 = vpop.f32.mrf.mxu0
      %v631 = vadd.f32 0.0, %v630
      %632 = vmatprep.mubr.f32.mxu0 0.0
      %633 = vmatmul.mubr.f32.gmra.mxu0 %v464
      %v634 = vpop.f32.mrf.mxu0
      %v635 = vadd.f32 0.0, %v634
      %v636 = vpop.f32.mrf.mxu0
      %v637 = vadd.f32 0.0, %v636
      %638 = vmatprep.mubr.f32.mxu0 0.0
      %639 = vmatmul.mubr.f32.gmra.mxu0 %v467
      %v640 = vpop.f32.mrf.mxu0
      %v641 = vadd.f32 0.0, %v640
      %v642 = vpop.f32.mrf.mxu0
      %v643 = vadd.f32 0.0, %v642
      %644 = vmatprep.mubr.f32.mxu0 0.0
      %645 = vmatmul.mubr.f32.gmra.mxu0 %v470
      %v646 = vpop.f32.mrf.mxu0
      %v647 = vadd.f32 0.0, %v646
      %v648 = vpop.f32.mrf.mxu0
      %v649 = vadd.f32 0.0, %v648
      %650 = vmatprep.mubr.f32.mxu0 0.0
      %651 = vmatmul.mubr.f32.gmra.mxu0 %v473
      %v652 = vpop.f32.mrf.mxu0
      %v653 = vadd.f32 0.0, %v652
      %v654 = vpop.f32.mrf.mxu0
      %v655 = vadd.f32 0.0, %v654
      %656 = vmatprep.mubr.f32.mxu0 0.0
      %657 = vmatmul.mubr.f32.gmra.mxu0 %v476
      %v658 = vpop.f32.mrf.mxu0
      %v659 = vadd.f32 0.0, %v658
      %v660 = vpop.f32.mrf.mxu0
      %v661 = vadd.f32 0.0, %v660
      %662 = vmatprep.mubr.f32.mxu0 0.0
      %663 = vmatmul.mubr.f32.gmra.mxu0 %v479
      %v664 = vpop.f32.mrf.mxu0
      %v665 = vadd.f32 0.0, %v664
      %v666 = vpop.f32.mrf.mxu0
      %v667 = vadd.f32 0.0, %v666
      %668 = vmatprep.mubr.f32.mxu0 0.0
      %669 = vmatmul.mubr.f32.gmra.mxu0 %v482
      %v670 = vpop.f32.mrf.mxu0
      %v671 = vadd.f32 0.0, %v670
      %v672 = vpop.f32.mrf.mxu0
      %v673 = vadd.f32 0.0, %v672
      %674 = vmatprep.mubr.f32.mxu0 0.0
      %675 = vmatmul.mubr.f32.gmra.mxu0 %v485
      %v676 = vpop.f32.mrf.mxu0
      %v677 = vadd.f32 0.0, %v676
      %v678 = vpop.f32.mrf.mxu0
      %v679 = vadd.f32 0.0, %v678
      %680 = vmatprep.mubr.f32.mxu0 0.0
      %681 = vmatmul.mubr.f32.gmra.mxu0 %v488
      %v682 = vpop.f32.mrf.mxu0
      %v683 = vadd.f32 0.0, %v682
      %v684 = vpop.f32.mrf.mxu0
      %v685 = vadd.f32 0.0, %v684
      %686 = vmatprep.mubr.f32.mxu0 0.0
      %687 = vmatmul.mubr.f32.gmra.mxu0 %v491
      %v688 = vpop.f32.mrf.mxu0
      %v689 = vadd.f32 0.0, %v688
      %v690 = vpop.f32.mrf.mxu0
      %v691 = vadd.f32 0.0, %v690
      %692 = vmatprep.mubr.f32.mxu0 0.0
      %693 = vmatmul.mubr.f32.gmra.mxu0 %v494
      %v694 = vpop.f32.mrf.mxu0
      %v695 = vadd.f32 0.0, %v694
      %v696 = vpop.f32.mrf.mxu0
      %v697 = vadd.f32 0.0, %v696
      %698 = vmatprep.mubr.f32.mxu0 0.0
      %699 = vmatmul.mubr.f32.gmra.mxu0 %v497
      %v700 = vpop.f32.mrf.mxu0
      %v701 = vadd.f32 0.0, %v700
      %v702 = vpop.f32.mrf.mxu0
      %v703 = vadd.f32 0.0, %v702
      %704 = vmatprep.mubr.f32.mxu0 0.0
      %705 = vmatmul.mubr.f32.gmra.mxu0 %v500
      %v706 = vpop.f32.mrf.mxu0
      %v707 = vadd.f32 0.0, %v706
      %v708 = vpop.f32.mrf.mxu0
      %v709 = vadd.f32 0.0, %v708
      %710 = vmatprep.mubr.f32.mxu0 0.0
      %711 = vmatmul.mubr.f32.gmra.mxu0 %v503
      %v712 = vpop.f32.mrf.mxu0
      %v713 = vadd.f32 0.0, %v712
      %v714 = vpop.f32.mrf.mxu0
      %v715 = vadd.f32 0.0, %v714
      %716 = vmatprep.mubr.f32.mxu0 0.0
      %717 = vmatmul.mubr.f32.gmra.mxu0 %v506
      %v718 = vpop.f32.mrf.mxu0
      %v719 = vadd.f32 0.0, %v718
      %v720 = vpop.f32.mrf.mxu0
      %v721 = vadd.f32 0.0, %v720
      %722 = vmatprep.mubr.f32.mxu0 0.0
      %723 = vmatmul.mubr.f32.gmra.mxu0 %v509
      %v724 = vpop.f32.mrf.mxu0
      %v725 = vadd.f32 0.0, %v724
      %v726 = vpop.f32.mrf.mxu0
      %v727 = vadd.f32 0.0, %v726
      %728 = vmatprep.mubr.f32.mxu0 0.0
      %729 = vmatmul.mubr.f32.gmra.mxu0 %v512
      %v730 = vpop.f32.mrf.mxu0
      %v731 = vadd.f32 0.0, %v730
      %v732 = vpop.f32.mrf.mxu0
      %v733 = vadd.f32 0.0, %v732
      %734 = vmatprep.mubr.f32.mxu0 0.0
      %735 = vmatmul.mubr.f32.gmra.mxu0 %v515
      %v736 = vpop.f32.mrf.mxu0
      %v737 = vadd.f32 0.0, %v736
      %v738 = vpop.f32.mrf.mxu0
      %v739 = vadd.f32 0.0, %v738
      %740 = vmatprep.mubr.f32.mxu0 0.0
      %741 = vmatmul.mubr.f32.gmra.mxu0 %v518
      %v742 = vpop.f32.mrf.mxu0
      %v743 = vadd.f32 0.0, %v742
      %v744 = vpop.f32.mrf.mxu0
      %v745 = vadd.f32 0.0, %v744
      %746 = vmatprep.mubr.f32.mxu0 0.0
      %747 = vmatmul.mubr.f32.gmra.mxu0 %v521
      %v748 = vpop.f32.mrf.mxu0
      %v749 = vadd.f32 0.0, %v748
      %v750 = vpop.f32.mrf.mxu0
      %v751 = vadd.f32 0.0, %v750
      %752 = vmatprep.mubr.f32.mxu0 0.0
      %753 = vmatmul.mubr.f32.gmra.mxu0 %v524
      %v754 = vpop.f32.mrf.mxu0
      %v755 = vadd.f32 0.0, %v754
      %v756 = vpop.f32.mrf.mxu0
      %v757 = vadd.f32 0.0, %v756
      %758 = vmatprep.mubr.f32.mxu0 0.0
      %759 = vmatmul.mubr.f32.gmra.mxu0 %v527
      %v760 = vpop.f32.mrf.mxu0
      %v761 = vadd.f32 0.0, %v760
      %v762 = vpop.f32.mrf.mxu0
      %v763 = vadd.f32 0.0, %v762
      %764 = vmatprep.mubr.f32.mxu0 0.0
      %765 = vmatmul.mubr.f32.gmra.mxu0 %v530
      %v766 = vpop.f32.mrf.mxu0
      %v767 = vadd.f32 0.0, %v766
      %v768 = vpop.f32.mrf.mxu0
      %v769 = vadd.f32 0.0, %v768
      %770 = vmatprep.mubr.f32.mxu0 0.0
      %771 = vmatmul.mubr.f32.gmra.mxu0 %v533
      %v772 = vpop.f32.mrf.mxu0
      %v773 = vadd.f32 0.0, %v772
      %v774 = vpop.f32.mrf.mxu0
      %v775 = vadd.f32 0.0, %v774
      %776 = vmatprep.mubr.f32.mxu0 0.0
      %777 = vmatmul.mubr.f32.gmra.mxu0 %v536
      %v778 = vpop.f32.mrf.mxu0
      %v779 = vadd.f32 0.0, %v778
      %v780 = vpop.f32.mrf.mxu0
      %v781 = vadd.f32 0.0, %v780
      %782 = vmatprep.mubr.f32.mxu0 0.0
      %783 = vmatmul.mubr.f32.gmra.mxu0 %v539
      %v784 = vpop.f32.mrf.mxu0
      %v785 = vadd.f32 0.0, %v784
      %v786 = vpop.f32.mrf.mxu0
      %v787 = vadd.f32 0.0, %v786
      %788 = vmatprep.mubr.f32.mxu0 0.0
      %789 = vmatmul.mubr.f32.gmra.mxu0 %v542
      %v790 = vpop.f32.mrf.mxu0
      %v791 = vadd.f32 0.0, %v790
      %v792 = vpop.f32.mrf.mxu0
      %v793 = vadd.f32 0.0, %v792
      %794 = vmatprep.mubr.f32.mxu0 0.0
      %795 = vmatmul.mubr.f32.gmra.mxu0 %v545
      %v796 = vpop.f32.mrf.mxu0
      %v797 = vadd.f32 0.0, %v796
      %v798 = vpop.f32.mrf.mxu0
      %v799 = vadd.f32 0.0, %v798
      %800 = vmatprep.mubr.f32.mxu0 0.0
      %801 = vmatmul.mubr.f32.gmra.mxu0 %v548
      %v802 = vpop.f32.mrf.mxu0
      %v803 = vadd.f32 0.0, %v802
      %v804 = vpop.f32.mrf.mxu0
      %v805 = vadd.f32 0.0, %v804
      %806 = vmatprep.mubr.f32.mxu0 0.0
      %807 = vmatmul.mubr.f32.gmra.mxu0 %v551
      %v808 = vpop.f32.mrf.mxu0
      %v809 = vadd.f32 0.0, %v808
      %v810 = vpop.f32.mrf.mxu0
      %v811 = vadd.f32 0.0, %v810
      %812 = vmatprep.mubr.f32.mxu0 0.0
      %813 = vmatmul.mubr.f32.gmra.mxu0 %v554
      %v814 = vpop.f32.mrf.mxu0
      %v815 = vadd.f32 0.0, %v814
      %v816 = vpop.f32.mrf.mxu0
      %v817 = vadd.f32 0.0, %v816
      %818 = vdwg.mxu0
      %v819 = vmax.f32 %v629, %v641
      %v820 = vmax.f32 %v635, %v647
      %v821 = vmax.f32 %v819, %v653
      %v822 = vmax.f32 %v820, %v659
      %v823 = vmax.f32 %v821, %v665
      %v824 = vmax.f32 %v822, %v671
      %v825 = vmax.f32 %v823, %v677
      %v826 = vmax.f32 %v824, %v683
      %v827 = vmax.f32 %v825, %v689
      %v828 = vmax.f32 %v826, %v695
      %v829 = vmax.f32 %v827, %v701
      %v830 = vmax.f32 %v828, %v707
      %v831 = vmax.f32 %v829, %v713
      %v832 = vmax.f32 %v830, %v719
      %v833 = vmax.f32 %v831, %v725
      %v834 = vmax.f32 %v832, %v731
      %v835 = vmax.f32 %v833, %v737
      %v836 = vmax.f32 %v834, %v743
      %v837 = vmax.f32 %v835, %v749
      %v838 = vmax.f32 %v836, %v755
      %v839 = vmax.f32 %v837, %v761
      %v840 = vmax.f32 %v838, %v767
      %v841 = vmax.f32 %v839, %v773
      %v842 = vmax.f32 %v840, %v779
      %v843 = vmax.f32 %v841, %v785
      %v844 = vmax.f32 %v842, %v791
      %v845 = vmax.f32 %v843, %v797
      %v846 = vmax.f32 %v844, %v803
      %v847 = vmax.f32 %v845, %v809
      %v848 = vmax.f32 %v846, %v815
      %v849 = vmax.f32 %v847, %v848
      %v850 = vrot.slane %v849, 4
      %v851 = vmax.f32 %v849, %v850
      %v852 = vrot.slane %v851, 2
      %v853 = vmax.f32 %v851, %v852
      %v854 = vrot.slane %v853, 1
      %v855 = vmax.f32 %v853, %v854
      %v856 = vmax.f32 %v631, %v643
      %v857 = vmax.f32 %v637, %v649
      %v858 = vmax.f32 %v856, %v655
      %v859 = vmax.f32 %v857, %v661
      %v860 = vmax.f32 %v858, %v667
      %v861 = vmax.f32 %v859, %v673
      %v862 = vmax.f32 %v860, %v679
      %v863 = vmax.f32 %v861, %v685
      %v864 = vmax.f32 %v862, %v691
      %v865 = vmax.f32 %v863, %v697
      %v866 = vmax.f32 %v864, %v703
      %v867 = vmax.f32 %v865, %v709
      %v868 = vmax.f32 %v866, %v715
      %v869 = vmax.f32 %v867, %v721
      %v870 = vmax.f32 %v868, %v727
      %v871 = vmax.f32 %v869, %v733
      %v872 = vmax.f32 %v870, %v739
      %v873 = vmax.f32 %v871, %v745
      %v874 = vmax.f32 %v872, %v751
      %v875 = vmax.f32 %v873, %v757
      %v876 = vmax.f32 %v874, %v763
      %v877 = vmax.f32 %v875, %v769
      %v878 = vmax.f32 %v876, %v775
      %v879 = vmax.f32 %v877, %v781
      %v880 = vmax.f32 %v878, %v787
      %v881 = vmax.f32 %v879, %v793
      %v882 = vmax.f32 %v880, %v799
      %v883 = vmax.f32 %v881, %v805
      %v884 = vmax.f32 %v882, %v811
      %v885 = vmax.f32 %v883, %v817
      %v886 = vmax.f32 %v884, %v885
      %v887 = vrot.slane %v886, 4
      %v888 = vmax.f32 %v886, %v887
      %v889 = vrot.slane %v888, 2
      %v890 = vmax.f32 %v888, %v889
      %v891 = vrot.slane %v890, 1
      %v892 = vmax.f32 %v890, %v891
      %v893 = vsub.f32 %v629, %v855
      %v894 = vsub.f32 %v631, %v892
      %v895 = vsub.f32 %v635, %v855
      %v896 = vsub.f32 %v637, %v892
      %v897 = vsub.f32 %v641, %v855
      %v898 = vsub.f32 %v643, %v892
      %v899 = vsub.f32 %v647, %v855
      %v900 = vsub.f32 %v649, %v892
      %v901 = vsub.f32 %v653, %v855
      %v902 = vsub.f32 %v655, %v892
      %v903 = vsub.f32 %v659, %v855
      %v904 = vsub.f32 %v661, %v892
      %v905 = vsub.f32 %v665, %v855
      %v906 = vsub.f32 %v667, %v892
      %v907 = vsub.f32 %v671, %v855
      %v908 = vsub.f32 %v673, %v892
      %v909 = vsub.f32 %v677, %v855
      %v910 = vsub.f32 %v679, %v892
      %v911 = vsub.f32 %v683, %v855
      %v912 = vsub.f32 %v685, %v892
      %v913 = vsub.f32 %v689, %v855
      %v914 = vsub.f32 %v691, %v892
      %v915 = vsub.f32 %v695, %v855
      %v916 = vsub.f32 %v697, %v892
      %v917 = vsub.f32 %v701, %v855
      %v918 = vsub.f32 %v703, %v892
      %v919 = vsub.f32 %v707, %v855
      %v920 = vsub.f32 %v709, %v892
      %v921 = vsub.f32 %v713, %v855
      %v922 = vsub.f32 %v715, %v892
      %v923 = vsub.f32 %v719, %v855
      %v924 = vsub.f32 %v721, %v892
      %v925 = vsub.f32 %v725, %v855
      %v926 = vsub.f32 %v727, %v892
      %v927 = vsub.f32 %v731, %v855
      %v928 = vsub.f32 %v733, %v892
      %v929 = vsub.f32 %v737, %v855
      %v930 = vsub.f32 %v739, %v892
      %v931 = vsub.f32 %v743, %v855
      %v932 = vsub.f32 %v745, %v892
      %v933 = vsub.f32 %v749, %v855
      %v934 = vsub.f32 %v751, %v892
      %v935 = vsub.f32 %v755, %v855
      %v936 = vsub.f32 %v757, %v892
      %v937 = vsub.f32 %v761, %v855
      %v938 = vsub.f32 %v763, %v892
      %v939 = vsub.f32 %v767, %v855
      %v940 = vsub.f32 %v769, %v892
      %v941 = vsub.f32 %v773, %v855
      %v942 = vsub.f32 %v775, %v892
      %v943 = vsub.f32 %v779, %v855
      %v944 = vsub.f32 %v781, %v892
      %v945 = vsub.f32 %v785, %v855
      %v946 = vsub.f32 %v787, %v892
      %v947 = vsub.f32 %v791, %v855
      %v948 = vsub.f32 %v793, %v892
      %v949 = vsub.f32 %v797, %v855
      %v950 = vsub.f32 %v799, %v892
      %v951 = vsub.f32 %v803, %v855
      %v952 = vsub.f32 %v805, %v892
      %v953 = vsub.f32 %v809, %v855
      %v954 = vsub.f32 %v811, %v892
      %v955 = vsub.f32 %v815, %v855
      %v956 = vsub.f32 %v817, %v892
      %v957 = vmul.f32 %v893, 1.442695
      %v958 = vpow.pop %v957
      %v959 = vmul.f32 %v894, 1.442695
      %v960 = vpow.pop %v959
      %v961 = vmul.f32 %v895, 1.442695
      %v962 = vpow.pop %v961
      %v963 = vmul.f32 %v896, 1.442695
      %v964 = vpow.pop %v963
      %v965 = vmul.f32 %v897, 1.442695
      %v966 = vpow.pop %v965
      %v967 = vmul.f32 %v898, 1.442695
      %v968 = vpow.pop %v967
      %v969 = vmul.f32 %v899, 1.442695
      %v970 = vpow.pop %v969
      %v971 = vmul.f32 %v900, 1.442695
      %v972 = vpow.pop %v971
      %v973 = vmul.f32 %v901, 1.442695
      %v974 = vpow.pop %v973
      %v975 = vmul.f32 %v902, 1.442695
      %v976 = vpow.pop %v975
      %v977 = vmul.f32 %v903, 1.442695
      %v978 = vpow.pop %v977
      %v979 = vmul.f32 %v904, 1.442695
      %v980 = vpow.pop %v979
      %v981 = vmul.f32 %v905, 1.442695
      %v982 = vpow.pop %v981
      %v983 = vmul.f32 %v906, 1.442695
      %v984 = vpow.pop %v983
      %v985 = vmul.f32 %v907, 1.442695
      %v986 = vpow.pop %v985
      %v987 = vmul.f32 %v908, 1.442695
      %v988 = vpow.pop %v987
      %v989 = vmul.f32 %v909, 1.442695
      %v990 = vpow.pop %v989
      %v991 = vmul.f32 %v910, 1.442695
      %v992 = vpow.pop %v991
      %v993 = vmul.f32 %v911, 1.442695
      %v994 = vpow.pop %v993
      %v995 = vmul.f32 %v912, 1.442695
      %v996 = vpow.pop %v995
      %v997 = vmul.f32 %v913, 1.442695
      %v998 = vpow.pop %v997
      %v999 = vmul.f32 %v914, 1.442695
      %v1000 = vpow.pop %v999
      %v1001 = vmul.f32 %v915, 1.442695
      %v1002 = vpow.pop %v1001
      %v1003 = vmul.f32 %v916, 1.442695
      %v1004 = vpow.pop %v1003
      %v1005 = vmul.f32 %v917, 1.442695
      %v1006 = vpow.pop %v1005
      %v1007 = vmul.f32 %v918, 1.442695
      %v1008 = vpow.pop %v1007
      %v1009 = vmul.f32 %v919, 1.442695
      %v1010 = vpow.pop %v1009
      %v1011 = vmul.f32 %v920, 1.442695
      %v1012 = vpow.pop %v1011
      %v1013 = vmul.f32 %v921, 1.442695
      %v1014 = vpow.pop %v1013
      %v1015 = vmul.f32 %v922, 1.442695
      %v1016 = vpow.pop %v1015
      %v1017 = vmul.f32 %v923, 1.442695
      %v1018 = vpow.pop %v1017
      %v1019 = vmul.f32 %v924, 1.442695
      %v1020 = vpow.pop %v1019
      %v1021 = vmul.f32 %v925, 1.442695
      %v1022 = vpow.pop %v1021
      %v1023 = vmul.f32 %v926, 1.442695
      %v1024 = vpow.pop %v1023
      %v1025 = vmul.f32 %v927, 1.442695
      %v1026 = vpow.pop %v1025
      %v1027 = vmul.f32 %v928, 1.442695
      %v1028 = vpow.pop %v1027
      %v1029 = vmul.f32 %v929, 1.442695
      %v1030 = vpow.pop %v1029
      %v1031 = vmul.f32 %v930, 1.442695
      %v1032 = vpow.pop %v1031
      %v1033 = vmul.f32 %v931, 1.442695
      %v1034 = vpow.pop %v1033
      %v1035 = vmul.f32 %v932, 1.442695
      %v1036 = vpow.pop %v1035
      %v1037 = vmul.f32 %v933, 1.442695
      %v1038 = vpow.pop %v1037
      %v1039 = vmul.f32 %v934, 1.442695
      %v1040 = vpow.pop %v1039
      %v1041 = vmul.f32 %v935, 1.442695
      %v1042 = vpow.pop %v1041
      %v1043 = vmul.f32 %v936, 1.442695
      %v1044 = vpow.pop %v1043
      %v1045 = vmul.f32 %v937, 1.442695
      %v1046 = vpow.pop %v1045
      %v1047 = vmul.f32 %v938, 1.442695
      %v1048 = vpow.pop %v1047
      %v1049 = vmul.f32 %v939, 1.442695
      %v1050 = vpow.pop %v1049
      %v1051 = vmul.f32 %v940, 1.442695
      %v1052 = vpow.pop %v1051
      %v1053 = vmul.f32 %v941, 1.442695
      %v1054 = vpow.pop %v1053
      %v1055 = vmul.f32 %v942, 1.442695
      %v1056 = vpow.pop %v1055
      %v1057 = vmul.f32 %v943, 1.442695
      %v1058 = vpow.pop %v1057
      %v1059 = vmul.f32 %v944, 1.442695
      %v1060 = vpow.pop %v1059
      %v1061 = vmul.f32 %v945, 1.442695
      %v1062 = vpow.pop %v1061
      %v1063 = vmul.f32 %v946, 1.442695
      %v1064 = vpow.pop %v1063
      %v1065 = vmul.f32 %v947, 1.442695
      %v1066 = vpow.pop %v1065
      %v1067 = vmul.f32 %v948, 1.442695
      %v1068 = vpow.pop %v1067
      %v1069 = vmul.f32 %v949, 1.442695
      %v1070 = vpow.pop %v1069
      %v1071 = vmul.f32 %v950, 1.442695
      %v1072 = vpow.pop %v1071
      %v1073 = vmul.f32 %v951, 1.442695
      %v1074 = vpow.pop %v1073
      %v1075 = vmul.f32 %v952, 1.442695
      %v1076 = vpow.pop %v1075
      %v1077 = vmul.f32 %v953, 1.442695
      %v1078 = vpow.pop %v1077
      %v1079 = vmul.f32 %v954, 1.442695
      %v1080 = vpow.pop %v1079
      %v1081 = vmul.f32 %v955, 1.442695
      %v1082 = vpow.pop %v1081
      %v1083 = vmul.f32 %v956, 1.442695
      %v1084 = vpow.pop %v1083
      %v1085 = vadd.f32 %v958, %v962
      %v1086 = vadd.f32 %v1085, %v966
      %v1087 = vadd.f32 %v1086, %v970
      %v1088 = vadd.f32 %v1087, %v974
      %v1089 = vadd.f32 %v1088, %v978
      %v1090 = vadd.f32 %v1089, %v982
      %v1091 = vadd.f32 %v1090, %v986
      %v1092 = vadd.f32 %v1091, %v990
      %v1093 = vadd.f32 %v1092, %v994
      %v1094 = vadd.f32 %v1093, %v998
      %v1095 = vadd.f32 %v1094, %v1002
      %v1096 = vadd.f32 %v1095, %v1006
      %v1097 = vadd.f32 %v1096, %v1010
      %v1098 = vadd.f32 %v1097, %v1014
      %v1099 = vadd.f32 %v1098, %v1018
      %v1100 = vadd.f32 %v1099, %v1022
      %v1101 = vadd.f32 %v1100, %v1026
      %v1102 = vadd.f32 %v1101, %v1030
      %v1103 = vadd.f32 %v1102, %v1034
      %v1104 = vadd.f32 %v1103, %v1038
      %v1105 = vadd.f32 %v1104, %v1042
      %v1106 = vadd.f32 %v1105, %v1046
      %v1107 = vadd.f32 %v1106, %v1050
      %v1108 = vadd.f32 %v1107, %v1054
      %v1109 = vadd.f32 %v1108, %v1058
      %v1110 = vadd.f32 %v1109, %v1062
      %v1111 = vadd.f32 %v1110, %v1066
      %v1112 = vadd.f32 %v1111, %v1070
      %v1113 = vadd.f32 %v1112, %v1074
      %v1114 = vadd.f32 %v1113, %v1078
      %v1115 = vadd.f32 %v1114, %v1082
      %v1116 = vrot.slane %v1115, 4
      %v1117 = vadd.f32 %v1115, %v1116
      %v1118 = vrot.slane %v1117, 2
      %v1119 = vadd.f32 %v1117, %v1118
      %v1120 = vrot.slane %v1119, 1
      %v1121 = vadd.f32 %v1119, %v1120
      %v1122 = vadd.f32 %v960, %v964
      %v1123 = vadd.f32 %v1122, %v968
      %v1124 = vadd.f32 %v1123, %v972
      %v1125 = vadd.f32 %v1124, %v976
      %v1126 = vadd.f32 %v1125, %v980
      %v1127 = vadd.f32 %v1126, %v984
      %v1128 = vadd.f32 %v1127, %v988
      %v1129 = vadd.f32 %v1128, %v992
      %v1130 = vadd.f32 %v1129, %v996
      %v1131 = vadd.f32 %v1130, %v1000
      %v1132 = vadd.f32 %v1131, %v1004
      %v1133 = vadd.f32 %v1132, %v1008
      %v1134 = vadd.f32 %v1133, %v1012
      %v1135 = vadd.f32 %v1134, %v1016
      %v1136 = vadd.f32 %v1135, %v1020
      %v1137 = vadd.f32 %v1136, %v1024
      %v1138 = vadd.f32 %v1137, %v1028
      %v1139 = vadd.f32 %v1138, %v1032
      %v1140 = vadd.f32 %v1139, %v1036
      %v1141 = vadd.f32 %v1140, %v1040
      %v1142 = vadd.f32 %v1141, %v1044
      %v1143 = vadd.f32 %v1142, %v1048
      %v1144 = vadd.f32 %v1143, %v1052
      %v1145 = vadd.f32 %v1144, %v1056
      %v1146 = vadd.f32 %v1145, %v1060
      %v1147 = vadd.f32 %v1146, %v1064
      %v1148 = vadd.f32 %v1147, %v1068
      %v1149 = vadd.f32 %v1148, %v1072
      %v1150 = vadd.f32 %v1149, %v1076
      %v1151 = vadd.f32 %v1150, %v1080
      %v1152 = vadd.f32 %v1151, %v1084
      %v1153 = vrot.slane %v1152, 4
      %v1154 = vadd.f32 %v1152, %v1153
      %v1155 = vrot.slane %v1154, 2
      %v1156 = vadd.f32 %v1154, %v1155
      %v1157 = vrot.slane %v1156, 1
      %v1158 = vadd.f32 %v1156, %v1157
      %v1159 = vrcp.pop %v1121
      %v1160 = vrcp.pop %v1158
      %v1161 = vpack.c.bf16 %v392, %v392
      %v1162 = vpack.c.bf16 %v394, %v394
      %v1163 = vpack.c.bf16 %v962, %v958
      %v1164 = vpack.c.bf16 %v964, %v960
      %v1165 = vpack.c.bf16 %v970, %v966
      %v1166 = vpack.c.bf16 %v972, %v968
      %v1167 = vpack.c.bf16 %v978, %v974
      %v1168 = vpack.c.bf16 %v980, %v976
      %v1169 = vpack.c.bf16 %v986, %v982
      %v1170 = vpack.c.bf16 %v988, %v984
      %v1171 = vpack.c.bf16 %v994, %v990
      %v1172 = vpack.c.bf16 %v996, %v992
      %v1173 = vpack.c.bf16 %v1002, %v998
      %v1174 = vpack.c.bf16 %v1004, %v1000
      %v1175 = vpack.c.bf16 %v1010, %v1006
      %v1176 = vpack.c.bf16 %v1012, %v1008
      %v1177 = vpack.c.bf16 %v1018, %v1014
      %v1178 = vpack.c.bf16 %v1020, %v1016
      %v1179 = vpack.c.bf16 %v1026, %v1022
      %v1180 = vpack.c.bf16 %v1028, %v1024
      %v1181 = vpack.c.bf16 %v1034, %v1030
      %v1182 = vpack.c.bf16 %v1036, %v1032
      %v1183 = vpack.c.bf16 %v1042, %v1038
      %v1184 = vpack.c.bf16 %v1044, %v1040
      %v1185 = vpack.c.bf16 %v1050, %v1046
      %v1186 = vpack.c.bf16 %v1052, %v1048
      %v1187 = vpack.c.bf16 %v1058, %v1054
      %v1188 = vpack.c.bf16 %v1060, %v1056
      %v1189 = vpack.c.bf16 %v1066, %v1062
      %v1190 = vpack.c.bf16 %v1068, %v1064
      %v1191 = vpack.c.bf16 %v1074, %v1070
      %v1192 = vpack.c.bf16 %v1076, %v1072
      %v1193 = vpack.c.bf16 %v1082, %v1078
      %v1194 = vpack.c.bf16 %v1084, %v1080
      %v1197 = vrot.slane %v1161, 2
      %v1198 = vrot.slane %v1162, 2
      %1201 = vmatprep.subr.bf16.mxu0 %v1178
      %1202 = vmatpush1.bf16.msra.mxu0 %v1177
      %1203 = vmatprep.subr.bf16.mxu0 %v1176
      %1204 = vmatpush1.bf16.msra.mxu0 %v1175
      %1205 = vmatprep.subr.bf16.mxu0 %v1174
      %1206 = vmatpush1.bf16.msra.mxu0 %v1173
      %1207 = vmatprep.subr.bf16.mxu0 %v1172
      %1208 = vmatpush1.bf16.msra.mxu0 %v1171
      %1209 = vmatprep.subr.bf16.mxu0 %v1170
      %1210 = vmatpush1.bf16.msra.mxu0 %v1169
      %1211 = vmatprep.subr.bf16.mxu0 %v1168
      %1212 = vmatpush1.bf16.msra.mxu0 %v1167
      %1213 = vmatprep.subr.bf16.mxu0 %v1166
      %1214 = vmatpush1.bf16.msra.mxu0 %v1165
      %1215 = vmatprep.subr.bf16.mxu0 %v1164
      %1216 = vmatpush1.bf16.msra.mxu0 %v1163
      %1217 = vmatprep.subr.bf16.mxu0 %v1194
      %1218 = vmatpush2.bf16.msra.mxu0 %v1193
      %1219 = vmatprep.subr.bf16.mxu0 %v1192
      %1220 = vmatpush2.bf16.msra.mxu0 %v1191
      %1221 = vmatprep.subr.bf16.mxu0 %v1190
      %1222 = vmatpush2.bf16.msra.mxu0 %v1189
      %1223 = vmatprep.subr.bf16.mxu0 %v1188
      %1224 = vmatpush2.bf16.msra.mxu0 %v1187
      %1225 = vmatprep.subr.bf16.mxu0 %v1186
      %1226 = vmatpush2.bf16.msra.mxu0 %v1185
      %1227 = vmatprep.subr.bf16.mxu0 %v1184
      %1228 = vmatpush2.bf16.msra.mxu0 %v1183
      %1229 = vmatprep.subr.bf16.mxu0 %v1182
      %1230 = vmatpush2.bf16.msra.mxu0 %v1181
      %1231 = vmatprep.subr.bf16.mxu0 %v1180
      %1232 = vmatpush2.bf16.msra.mxu0 %v1179
      %1233 = vmatprep.mubr.bf16.mxu0 %v1198
      %1234 = vmatmul.mubr.bf16.gmra.mxu0 %v1197
      %v1235 = vpop.f32.mrf.mxu0
      %v1236 = vadd.f32 0.0, %v1235
      %v1237 = vpop.f32.mrf.mxu0
      %v1238 = vadd.f32 0.0, %v1237
      %v1239 = vpop.f32.mrf.mxu0
      %v1240 = vpop.f32.mrf.mxu0
      %1241 = vdwg.mxu0
      %v1242 = vmul.f32 %v1236, %v1159
      %v1243 = vmul.f32 %v1238, %v1160
      %v1246 = vcombine.low %v1242, %v1243
      %1248 = vst [vmem:[%s224] sm:$0xff] %v1246
      %p1249 = scmp.lt.s32.totalorder %s16, 1
      %s1250 = scalar_select %p1249, %s16, 1
      %s1251 = smul.addr %s1250, 2
      %s1252 = smul.addr %s1251, 4
      %s1253 = scalar_lea.vmem %s5, %s1252
      // Predicated region
      $region41: #{_lambda_.1} parent=39 // pred_check
        %p1254 = pneg %p144
      $region42: #{_lambda_.1} parent=39 // pred_check_branch
        %1256 = sbr.rel (%p1254) target = $region44
      $region43: #{_lambda_.1} parent=39 // pred_region
        _
      $region44: #{_lambda_.1} parent=39 // pred_fallthru
        _
    $region40: #{_lambda_.1} parent=5 // pred_fallthru
      _
    %p1257 = scmp.le.s32.totalorder 2, %s11
    // Predicated region
    $region45: #{_lambda_.1} parent=5 // pred_check
      %p1258 = pneg %p1257
    $region46: #{_lambda_.1} parent=5 // pred_check_branch
      %1260 = sbr.rel (%p1258) target = $region48
    $region47: #{_lambda_.1} parent=5 // pred_region
      %s1261 = ssub.s32 %s11, 2
      // Predicated region
      $region49: #{_lambda_.1} parent=47 // pred_check
        %p1262 = pneg %p150
      $region50: #{_lambda_.1} parent=47 // pred_check_branch
        %1264 = sbr.rel (%p1262) target = $region52
      $region51: #{_lambda_.1} parent=47 // pred_region
        %p1265 = scmp.lt.s32.totalorder %s17, 1
        %s1266 = scalar_select %p1265, %s17, 1
        %s1267 = smul.addr %s1266, 2
        %s1268 = smul.addr %s1267, 4
        %s1269 = scalar_lea.vmem %s5, %s1268
      $region52: #{_lambda_.1} parent=47 // pred_fallthru
        _
    $region48: #{_lambda_.1} parent=5 // pred_fallthru
      _
  $region6: #{_lambda_.1} parent=0 // loop_footer
    %s15 = sadd.s32 1, %s11
  $region7: #{_lambda_.1} parent=0 // loop_footer_branch
    %10 = sbr.rel target = $region3
  $region8: #{_lambda_.1} parent=0 // loop_exit
    _

</llo_original>
